<compile_context>
chip_gen: v6e
topology: v6e:2x2x1
jax: 0.10.0
libtpu: 0.0.40
codegen_flags: <defaults>
</compile_context>

<pallas_src>
import jax
import jax.numpy as jnp
from jax.experimental import pallas as pl
from jax.experimental.pallas import tpu as pltpu


# ----------------------------- Pallas kernel ------------------------------

def make_fused_kernel(c_out):
    def kernel(p_ref, wc_ref, bc_ref, w1_ref, b1_ref, w2_ref, b2_ref, o_ref):
        # p_ref : (1, KK, P)    wc_ref: (C, KK)   bc_ref: (C, 1)
        # w1_ref: (C, P, H1)    b1_ref: (1, H1)
        # w2_ref: (H1, 2)       b2_ref: (1, 2)    o_ref : (1, 1, 2)
        patches_t = p_ref[0]                                       # (KK, P)

        # conv1 + bias + ReLU, directly in NCHW-flatten layout: (C, P)
        conv = jnp.dot(wc_ref[...], patches_t,
                       preferred_element_type=jnp.float32)
        conv = jnp.maximum(conv + bc_ref[...], 0.0)

        # d1: h = bias + sum_c conv[c, :] @ w1[c]   (static unroll, C=5)
        h = b1_ref[...]                                            # (1, H1)
        for c in range(c_out):
            h = h + jnp.dot(conv[c:c + 1, :], w1_ref[c],
                            preferred_element_type=jnp.float32)
        h = jnp.maximum(h, 0.0)

        # d2 + softmax
        logits = jnp.dot(h, w2_ref[...],
                         preferred_element_type=jnp.float32) + b2_ref[...]
        m = jnp.max(logits, axis=1, keepdims=True)
        e = jnp.exp(logits - m)
        denom = jnp.sum(e, axis=1, keepdims=True)
        o_ref[0] = e * pl.reciprocal(denom, approx=True)
    return kernel


# ------------------------------ JAX wrapper -------------------------------

def prepare_params(params, img_shape, k=10):
    """Hoisted (per-model, not per-call) weight relayout into kernel layout."""
    c_out = params["conv_w"].shape[0]
    oh, ow = img_shape[0] - k + 1, img_shape[1] - k + 1
    p = oh * ow
    h1 = params["d1_w"].shape[0]
    return dict(
        wc=params["conv_w"].reshape(c_out, k * k),        # (C, KK)
        bc=params["conv_b"].reshape(c_out, 1),            # (C, 1)
        w1r=params["d1_w"].T.reshape(c_out, p, h1),       # (C, P, H1), c-major matches NCHW flatten
        b1=params["d1_b"].reshape(1, h1),                 # (1, H1)
        w2=params["d2_w"].T,                              # (H1, 2)
        b2=params["d2_b"].reshape(1, -1),                 # (1, 2)
    )


def mymodel_forward(x, prep, k=10):
    """x: (N, 1, H, W) float32 (NCHW, matching the PyTorch module)."""
    n, cin, hh, ww = x.shape
    assert cin == 1
    oh, ow = hh - k + 1, ww - k + 1
    p = oh * ow
    kk = k * k
    c_out, _, h1 = prep["w1r"].shape

    # Single-op im2col: (N, KK, OH, OW) since C_in == 1; kernel offsets row-major.
    patches = jax.lax.conv_general_dilated_patches(
        x, filter_shape=(k, k), window_strides=(1, 1), padding="VALID")
    patches = patches.reshape(n, kk, p)                   # (N, KK, P)

    out3 = pl.pallas_call(
        make_fused_kernel(c_out),
        out_shape=jax.ShapeDtypeStruct((n, 1, 2), jnp.float32),
        grid_spec=pltpu.PrefetchScalarGridSpec(
            num_scalar_prefetch=0,
            grid=(n,),
            in_specs=[
                pl.BlockSpec((1, kk, p), lambda i: (i, 0, 0)),       # patches (per sample)
                pl.BlockSpec((c_out, kk), lambda i: (0, 0)),         # conv weight (resident)
                pl.BlockSpec((c_out, 1), lambda i: (0, 0)),          # conv bias
                pl.BlockSpec((c_out, p, h1), lambda i: (0, 0, 0)),   # d1 weight (resident)
                pl.BlockSpec((1, h1), lambda i: (0, 0)),             # d1 bias
                pl.BlockSpec((h1, 2), lambda i: (0, 0)),             # d2 weight
                pl.BlockSpec((1, 2), lambda i: (0, 0)),              # d2 bias
            ],
            out_specs=pl.BlockSpec((1, 1, 2), lambda i: (i, 0, 0)),
        ),
        compiler_params=pltpu.CompilerParams(
            dimension_semantics=("parallel",),
        ),
    )(patches, prep["wc"], prep["bc"], prep["w1r"], prep["b1"],
      prep["w2"], prep["b2"])
    return out3.reshape(n, 2)


# ----------------------- reference & initialization ------------------------

def reference_forward(x, params):
    conv = jax.lax.conv_general_dilated(
        x, params["conv_w"], window_strides=(1, 1), padding="VALID",
        dimension_numbers=("NCHW", "OIHW", "NCHW"))
    conv = jnp.maximum(conv + params["conv_b"].reshape(1, -1, 1, 1), 0.0)
    feat = conv.reshape(x.shape[0], -1)
    h = jnp.maximum(feat @ params["d1_w"].T + params["d1_b"], 0.0)
    logits = h @ params["d2_w"].T + params["d2_b"]
    return jax.nn.softmax(logits, axis=1)


def init_params(key, img_shape, k=10, c_out=5, d1_out=64):
    h, w = img_shape
    d1_in = c_out * (h - k + 1) * (w - k + 1)
    ks = jax.random.split(key, 6)

    def uniform(kk_, shape, fan_in):
        bound = 1.0 / jnp.sqrt(fan_in)
        return jax.random.uniform(kk_, shape, jnp.float32, -bound, bound)

    return {
        "conv_w": uniform(ks[0], (c_out, 1, k, k), 1 * k * k),
        "conv_b": uniform(ks[1], (c_out,), 1 * k * k),
        "d1_w": uniform(ks[2], (d1_out, d1_in), d1_in),
        "d1_b": uniform(ks[3], (d1_out,), d1_in),
        "d2_w": uniform(ks[4], (2, d1_out), d1_out),
        "d2_b": uniform(ks[5], (2,), d1_out),
    }


if __name__ == "__main__":
    key = jax.random.PRNGKey(0)
    img_shape = (16, 16)          # H, W
    batch = 2

    pkey, xkey = jax.random.split(key)
    params = init_params(pkey, img_shape)
    prep = prepare_params(params, img_shape)        # one-time weight relayout
    x = jax.random.normal(xkey, (batch, 1, img_shape[0], img_shape[1]), jnp.float32)

    fwd = jax.jit(mymodel_forward)
    out = jax.block_until_ready(fwd(x, prep))
    assert out.shape == (batch, 2)

    # softmax rows sum to 1 (approx reciprocal -> loose tolerance)
    assert bool(jnp.allclose(jnp.sum(out, axis=1), 1.0, atol=1e-3))

    # check against a pure-JAX reference of the PyTorch forward
    ref = jax.block_until_ready(jax.jit(reference_forward)(x, params))
    assert bool(jnp.allclose(out, ref, atol=2e-3, rtol=2e-3))

    print("KERNEL_OK")
</pallas_src>

<mosaic_0001>
module attributes {stable_mosaic.version = 11 : i64} {
  func.func @kernel(%arg0: i32, %arg1: memref<1x100x49xf32, #tpu.memory_space<vmem>>, %arg2: memref<5x100xf32, #tpu.memory_space<vmem>>, %arg3: memref<5x1xf32, #tpu.memory_space<vmem>>, %arg4: memref<5x49x64xf32, #tpu.memory_space<vmem>>, %arg5: memref<1x64xf32, #tpu.memory_space<vmem>>, %arg6: memref<64x2xf32, #tpu.memory_space<vmem>>, %arg7: memref<1x2xf32, #tpu.memory_space<vmem>>, %arg8: memref<1x1x2xf32, #tpu.memory_space<vmem>>) attributes {dimension_semantics = [#tpu.dimension_semantics<parallel>], iteration_bounds = array<i64: 2>, scalar_prefetch = 0 : i64, scratch_operands = 0 : i64, tpu.core_type = #tpu.core_type<tc>, window_params = [{transform_indices = @transform_0, window_bounds = array<i64: 1, 100, 49>}, {pipeline_mode = #tpu.pipeline_mode<synchronous>, transform_indices = @transform_1, window_bounds = array<i64: 5, 100>}, {pipeline_mode = #tpu.pipeline_mode<synchronous>, transform_indices = @transform_2, window_bounds = array<i64: 5, 1>}, {pipeline_mode = #tpu.pipeline_mode<synchronous>, transform_indices = @transform_3, window_bounds = array<i64: 5, 49, 64>}, {pipeline_mode = #tpu.pipeline_mode<synchronous>, transform_indices = @transform_4, window_bounds = array<i64: 1, 64>}, {pipeline_mode = #tpu.pipeline_mode<synchronous>, transform_indices = @transform_5, window_bounds = array<i64: 64, 2>}, {pipeline_mode = #tpu.pipeline_mode<synchronous>, transform_indices = @transform_6, window_bounds = array<i64: 1, 2>}, {transform_indices = @transform_7, window_bounds = array<i64: 1, 1, 2>}]} {
    %c0 = arith.constant 0 : index
    %c0_0 = arith.constant 0 : index
    %c0_1 = arith.constant 0 : index
    %0 = vector.load %arg1[%c0, %c0_0, %c0_1] : memref<1x100x49xf32, #tpu.memory_space<vmem>>, vector<1x100x49xf32>
    %1 = vector.shape_cast %0 : vector<1x100x49xf32> to vector<100x49xf32>
    %c0_2 = arith.constant 0 : index
    %c0_3 = arith.constant 0 : index
    %2 = vector.load %arg2[%c0_2, %c0_3] : memref<5x100xf32, #tpu.memory_space<vmem>>, vector<5x100xf32>
    %cst = arith.constant dense<0.000000e+00> : vector<5x49xf32>
    %3 = tpu.matmul %2, %1, %cst {dimension_numbers = #tpu.dot_dimension_numbers<[1], [0], [0], [1], [0, 0, 1, 1], [], []>} : vector<5x100xf32>, vector<100x49xf32>, vector<5x49xf32> -> vector<5x49xf32>
    %c0_4 = arith.constant 0 : index
    %c0_5 = arith.constant 0 : index
    %4 = vector.load %arg3[%c0_4, %c0_5] : memref<5x1xf32, #tpu.memory_space<vmem>>, vector<5x1xf32>
    %5 = vector.broadcast %4 : vector<5x1xf32> to vector<5x49xf32>
    %6 = arith.addf %3, %5 : vector<5x49xf32>
    %cst_6 = arith.constant 0.000000e+00 : f32
    %7 = vector.broadcast %cst_6 : f32 to vector<5x49xf32>
    %8 = arith.maximumf %6, %7 : vector<5x49xf32>
    %c0_7 = arith.constant 0 : index
    %c0_8 = arith.constant 0 : index
    %9 = vector.load %arg5[%c0_7, %c0_8] : memref<1x64xf32, #tpu.memory_space<vmem>>, vector<1x64xf32>
    %10 = vector.extract_strided_slice %8 {offsets = [0, 0], sizes = [1, 49], strides = [1, 1]} : vector<5x49xf32> to vector<1x49xf32>
    %c0_9 = arith.constant 0 : index
    %c0_10 = arith.constant 0 : index
    %c0_11 = arith.constant 0 : index
    %11 = vector.load %arg4[%c0_9, %c0_10, %c0_11] : memref<5x49x64xf32, #tpu.memory_space<vmem>>, vector<1x49x64xf32>
    %12 = vector.shape_cast %11 : vector<1x49x64xf32> to vector<49x64xf32>
    %cst_12 = arith.constant dense<0.000000e+00> : vector<1x64xf32>
    %13 = tpu.matmul %10, %12, %cst_12 {dimension_numbers = #tpu.dot_dimension_numbers<[1], [0], [0], [1], [0, 0, 1, 1], [], []>} : vector<1x49xf32>, vector<49x64xf32>, vector<1x64xf32> -> vector<1x64xf32>
    %14 = arith.addf %9, %13 : vector<1x64xf32>
    %15 = vector.extract_strided_slice %8 {offsets = [1, 0], sizes = [1, 49], strides = [1, 1]} : vector<5x49xf32> to vector<1x49xf32>
    %c1 = arith.constant 1 : index
    %c0_13 = arith.constant 0 : index
    %c0_14 = arith.constant 0 : index
    %16 = vector.load %arg4[%c1, %c0_13, %c0_14] : memref<5x49x64xf32, #tpu.memory_space<vmem>>, vector<1x49x64xf32>
    %17 = vector.shape_cast %16 : vector<1x49x64xf32> to vector<49x64xf32>
    %cst_15 = arith.constant dense<0.000000e+00> : vector<1x64xf32>
    %18 = tpu.matmul %15, %17, %cst_15 {dimension_numbers = #tpu.dot_dimension_numbers<[1], [0], [0], [1], [0, 0, 1, 1], [], []>} : vector<1x49xf32>, vector<49x64xf32>, vector<1x64xf32> -> vector<1x64xf32>
    %19 = arith.addf %14, %18 : vector<1x64xf32>
    %20 = vector.extract_strided_slice %8 {offsets = [2, 0], sizes = [1, 49], strides = [1, 1]} : vector<5x49xf32> to vector<1x49xf32>
    %c2 = arith.constant 2 : index
    %c0_16 = arith.constant 0 : index
    %c0_17 = arith.constant 0 : index
    %21 = vector.load %arg4[%c2, %c0_16, %c0_17] : memref<5x49x64xf32, #tpu.memory_space<vmem>>, vector<1x49x64xf32>
    %22 = vector.shape_cast %21 : vector<1x49x64xf32> to vector<49x64xf32>
    %cst_18 = arith.constant dense<0.000000e+00> : vector<1x64xf32>
    %23 = tpu.matmul %20, %22, %cst_18 {dimension_numbers = #tpu.dot_dimension_numbers<[1], [0], [0], [1], [0, 0, 1, 1], [], []>} : vector<1x49xf32>, vector<49x64xf32>, vector<1x64xf32> -> vector<1x64xf32>
    %24 = arith.addf %19, %23 : vector<1x64xf32>
    %25 = vector.extract_strided_slice %8 {offsets = [3, 0], sizes = [1, 49], strides = [1, 1]} : vector<5x49xf32> to vector<1x49xf32>
    %c3 = arith.constant 3 : index
    %c0_19 = arith.constant 0 : index
    %c0_20 = arith.constant 0 : index
    %26 = vector.load %arg4[%c3, %c0_19, %c0_20] : memref<5x49x64xf32, #tpu.memory_space<vmem>>, vector<1x49x64xf32>
    %27 = vector.shape_cast %26 : vector<1x49x64xf32> to vector<49x64xf32>
    %cst_21 = arith.constant dense<0.000000e+00> : vector<1x64xf32>
    %28 = tpu.matmul %25, %27, %cst_21 {dimension_numbers = #tpu.dot_dimension_numbers<[1], [0], [0], [1], [0, 0, 1, 1], [], []>} : vector<1x49xf32>, vector<49x64xf32>, vector<1x64xf32> -> vector<1x64xf32>
    %29 = arith.addf %24, %28 : vector<1x64xf32>
    %30 = vector.extract_strided_slice %8 {offsets = [4, 0], sizes = [1, 49], strides = [1, 1]} : vector<5x49xf32> to vector<1x49xf32>
    %c4 = arith.constant 4 : index
    %c0_22 = arith.constant 0 : index
    %c0_23 = arith.constant 0 : index
    %31 = vector.load %arg4[%c4, %c0_22, %c0_23] : memref<5x49x64xf32, #tpu.memory_space<vmem>>, vector<1x49x64xf32>
    %32 = vector.shape_cast %31 : vector<1x49x64xf32> to vector<49x64xf32>
    %cst_24 = arith.constant dense<0.000000e+00> : vector<1x64xf32>
    %33 = tpu.matmul %30, %32, %cst_24 {dimension_numbers = #tpu.dot_dimension_numbers<[1], [0], [0], [1], [0, 0, 1, 1], [], []>} : vector<1x49xf32>, vector<49x64xf32>, vector<1x64xf32> -> vector<1x64xf32>
    %34 = arith.addf %29, %33 : vector<1x64xf32>
    %cst_25 = arith.constant 0.000000e+00 : f32
    %35 = vector.broadcast %cst_25 : f32 to vector<1x64xf32>
    %36 = arith.maximumf %34, %35 : vector<1x64xf32>
    %c0_26 = arith.constant 0 : index
    %c0_27 = arith.constant 0 : index
    %37 = vector.load %arg6[%c0_26, %c0_27] : memref<64x2xf32, #tpu.memory_space<vmem>>, vector<64x2xf32>
    %cst_28 = arith.constant dense<0.000000e+00> : vector<1x2xf32>
    %38 = tpu.matmul %36, %37, %cst_28 {dimension_numbers = #tpu.dot_dimension_numbers<[1], [0], [0], [1], [0, 0, 1, 1], [], []>} : vector<1x64xf32>, vector<64x2xf32>, vector<1x2xf32> -> vector<1x2xf32>
    %c0_29 = arith.constant 0 : index
    %c0_30 = arith.constant 0 : index
    %39 = vector.load %arg7[%c0_29, %c0_30] : memref<1x2xf32, #tpu.memory_space<vmem>>, vector<1x2xf32>
    %40 = arith.addf %38, %39 : vector<1x2xf32>
    %cst_31 = arith.constant dense<0xFF800000> : vector<1xf32>
    %41 = vector.multi_reduction <maximumf>, %40, %cst_31 [1] : vector<1x2xf32> to vector<1xf32>
    %42 = vector.shape_cast %41 : vector<1xf32> to vector<1x1xf32>
    %43 = vector.broadcast %42 : vector<1x1xf32> to vector<1x2xf32>
    %44 = arith.subf %40, %43 : vector<1x2xf32>
    %45 = math.exp %44 : vector<1x2xf32>
    %cst_32 = arith.constant dense<0.000000e+00> : vector<1xf32>
    %46 = vector.multi_reduction <add>, %45, %cst_32 [1] : vector<1x2xf32> to vector<1xf32>
    %47 = vector.shape_cast %46 : vector<1xf32> to vector<1x1xf32>
    %48 = tpu.reciprocal %47 {approx = true} : vector<1x1xf32> -> vector<1x1xf32>
    %49 = vector.broadcast %48 : vector<1x1xf32> to vector<1x2xf32>
    %50 = arith.mulf %45, %49 : vector<1x2xf32>
    %c0_33 = arith.constant 0 : index
    %c0_34 = arith.constant 0 : index
    %c0_35 = arith.constant 0 : index
    %51 = vector.load %arg8[%c0_33, %c0_34, %c0_35] : memref<1x1x2xf32, #tpu.memory_space<vmem>>, vector<1x1x2xf32>
    %52 = vector.shape_cast %51 : vector<1x1x2xf32> to vector<1x2xf32>
    %53 = vector.shape_cast %50 : vector<1x2xf32> to vector<1x1x2xf32>
    tpu.vector_store %arg8[%c0_33, %c0_34, %c0_35], %53 {strides = array<i32>} : memref<1x1x2xf32, #tpu.memory_space<vmem>>, vector<1x1x2xf32>,
    return
  }
  func.func @transform_0(%arg0: i32) -> (i32, i32, i32) {
    %c0_i32 = arith.constant 0 : i32
    %c0_i32_0 = arith.constant 0 : i32
    %c0_i32_1 = arith.constant 0 : i32
    return %arg0, %c0_i32, %c0_i32_0 : i32, i32, i32
  }
  func.func @transform_1(%arg0: i32) -> (i32, i32) {
    %c0_i32 = arith.constant 0 : i32
    %c0_i32_0 = arith.constant 0 : i32
    %c0_i32_1 = arith.constant 0 : i32
    return %c0_i32, %c0_i32_0 : i32, i32
  }
  func.func @transform_2(%arg0: i32) -> (i32, i32) {
    %c0_i32 = arith.constant 0 : i32
    %c0_i32_0 = arith.constant 0 : i32
    %c0_i32_1 = arith.constant 0 : i32
    return %c0_i32, %c0_i32_0 : i32, i32
  }
  func.func @transform_3(%arg0: i32) -> (i32, i32, i32) {
    %c0_i32 = arith.constant 0 : i32
    %c0_i32_0 = arith.constant 0 : i32
    %c0_i32_1 = arith.constant 0 : i32
    %c0_i32_2 = arith.constant 0 : i32
    return %c0_i32, %c0_i32_0, %c0_i32_1 : i32, i32, i32
  }
  func.func @transform_4(%arg0: i32) -> (i32, i32) {
    %c0_i32 = arith.constant 0 : i32
    %c0_i32_0 = arith.constant 0 : i32
    %c0_i32_1 = arith.constant 0 : i32
    return %c0_i32, %c0_i32_0 : i32, i32
  }
  func.func @transform_5(%arg0: i32) -> (i32, i32) {
    %c0_i32 = arith.constant 0 : i32
    %c0_i32_0 = arith.constant 0 : i32
    %c0_i32_1 = arith.constant 0 : i32
    return %c0_i32, %c0_i32_0 : i32, i32
  }
  func.func @transform_6(%arg0: i32) -> (i32, i32) {
    %c0_i32 = arith.constant 0 : i32
    %c0_i32_0 = arith.constant 0 : i32
    %c0_i32_1 = arith.constant 0 : i32
    return %c0_i32, %c0_i32_0 : i32, i32
  }
  func.func @transform_7(%arg0: i32) -> (i32, i32, i32) {
    %c0_i32 = arith.constant 0 : i32
    %c0_i32_0 = arith.constant 0 : i32
    %c0_i32_1 = arith.constant 0 : i32
    return %arg0, %c0_i32, %c0_i32_0 : i32, i32, i32
  }
}

</mosaic_0001>

<llo_original>
// kernel: mymodel_forward.1
$region0: #{mymodel_forward.1}
  #allocation0 [shape = 'u32[]', space=smem, size = 0x4, offset = 0x4, fixed_abs, tag = 'smem constant byte address 0x4 - core index']
  #allocation1 [shape = 'u32[144,128]{1,0:T(1,128)}', space=vmem, size = 0x12000, scoped, tag = 'internal scratch']
  %s0 = inlined_call_operand.vmem [shape: f32[2,100,49], index: 0, kind: input, shape index: {}]
  %s1 = inlined_call_operand.vmem [shape: f32[5,100], index: 1, kind: input, shape index: {}]
  %s2 = inlined_call_operand.vmem [shape: f32[5,1], index: 2, kind: input, shape index: {}]
  %s3 = inlined_call_operand.vmem [shape: f32[5,49,64], index: 3, kind: input, shape index: {}]
  %s4 = inlined_call_operand.vmem [shape: f32[1,64], index: 4, kind: input, shape index: {}]
  %s5 = inlined_call_operand.vmem [shape: f32[64,2], index: 5, kind: input, shape index: {}]
  %s6 = inlined_call_operand.vmem [shape: f32[1,2], index: 6, kind: input, shape index: {}]
  %s7 = inlined_call_operand.hbm [shape: f32[2,1,2], index: 7, kind: output, shape index: {}]
  %s8 = sld [smem:[#allocation0]]
  $region61: #{mymodel_forward.1} parent=0
    _
  %s10 = ssub.s32 1, %s8
  %s11 = scalar_select 0, %s10, %s8
  $region1: #{mymodel_forward.1} parent=0
    #allocation2 [shape = 'u8[1024]{0}', space=vmem, size = 0x400, scoped, tag = 'output window, operand 0']
    #allocation3 [shape = 's32[2]{0}', space=sflag, size = 0x8, scoped, tag = 'scoped memory for mymodel_forward.1']
    %12 = vsyncpa [#allocation3], 0
    %s13 = scalar_lea.sflag [#allocation3], 1
    %14 = vsyncpa %s13, 0
    loop: start=0, step=1, limit=4
    $region2: #{mymodel_forward.1} parent=1 // loop_pre_header
      _
    $region3: #{mymodel_forward.1} parent=1 // loop_header
      %s16 = sphi 0, %s20
      %p17 = scmp.ge.s32.totalorder %s16, 4
      %s26 = sphi 0, %s28
      %s29 = sphi 0, %s26
      %s30 = sphi 0, %s29
      %s46 = sphi 0, %s30
      %s50 = sphi 0, %s50
      %s52 = sphi 0, %s50
      %s53 = sphi 0, %s52
      %s67 = sphi 0, %s53
      %s71 = sphi 0, %s71
      %s73 = sphi 0, %s71
      %s74 = sphi 0, %s73
      %s88 = sphi 0, %s74
      %s92 = sphi 0, %s92
      %s94 = sphi 0, %s92
      %s95 = sphi 0, %s94
      %s109 = sphi 0, %s95
      %s113 = sphi 0, %s113
      %s115 = sphi 0, %s113
      %s116 = sphi 0, %s115
      %s130 = sphi 0, %s116
      %s134 = sphi 0, %s134
      %s136 = sphi 0, %s134
      %s137 = sphi 0, %s136
      %s151 = sphi 0, %s137
      %s155 = sphi 0, %s155
      %s157 = sphi 0, %s155
      %s158 = sphi 0, %s157
      %s172 = sphi 0, %s158
      %s178 = sphi 0, %s180
      %s181 = sphi 0, %s178
      %s182 = sphi 0, %s181
      %s198 = sphi 0, %s182
    $region4: #{mymodel_forward.1} parent=1 // loop_header_branch
      %19 = sbr.rel (%p17) target = $region8
    $region5: #{mymodel_forward.1} parent=1 // loop_body
      %s21 = ssub.s32 %s16, 1
      %s22 = ssub.s32 %s16, 2
      %s23 = sadd.s32 %s16, 1
      %s24 = ssub.s32 %s16, %s23
      %p25 = scmp.eq.s32.totalorder %s24, 0
      %s27 = sadd.s32 %s26, 1
      %s28 = scalar_select %p25, %s26, %s27
      %p31 = pneg %p25
      %p32 = scmp.eq.s32.totalorder %s16, 1
      %p33 = por %p31, %p32
      %p34 = scmp.ne.s32.totalorder %s26, %s29
      %p35 = scmp.eq.s32.totalorder %s16, 0
      %p36 = por %p34, %p35
      %p37 = scmp.ne.s32.totalorder %s26, %s29
      %p38 = scmp.eq.s32.totalorder %s21, 1
      %p39 = por %p37, %p38
      %p40 = scmp.ne.s32.totalorder %s29, %s30
      %p41 = scmp.eq.s32.totalorder %s21, 0
      %p42 = por %p40, %p41
      %p43 = scmp.ne.s32.totalorder %s29, %s30
      %p44 = scmp.eq.s32.totalorder %s22, 1
      %p45 = por %p43, %p44
      %p47 = scmp.ne.s32.totalorder %s30, %s46
      %p48 = scmp.eq.s32.totalorder %s22, 0
      %p49 = por %p47, %p48
      %s51 = sadd.s32 %s50, 1
      %p54 = scmp.eq.s32.totalorder %s16, 1
      %p55 = scmp.ne.s32.totalorder %s50, %s52
      %p56 = scmp.eq.s32.totalorder %s16, 0
      %p57 = por %p55, %p56
      %p58 = scmp.ne.s32.totalorder %s50, %s52
      %p59 = scmp.eq.s32.totalorder %s21, 1
      %p60 = por %p58, %p59
      %p61 = scmp.ne.s32.totalorder %s52, %s53
      %p62 = scmp.eq.s32.totalorder %s21, 0
      %p63 = por %p61, %p62
      %p64 = scmp.ne.s32.totalorder %s52, %s53
      %p65 = scmp.eq.s32.totalorder %s22, 1
      %p66 = por %p64, %p65
      %p68 = scmp.ne.s32.totalorder %s53, %s67
      %p69 = scmp.eq.s32.totalorder %s22, 0
      %p70 = por %p68, %p69
      %s72 = sadd.s32 %s71, 1
      %p75 = scmp.eq.s32.totalorder %s16, 1
      %p76 = scmp.ne.s32.totalorder %s71, %s73
      %p77 = scmp.eq.s32.totalorder %s16, 0
      %p78 = por %p76, %p77
      %p79 = scmp.ne.s32.totalorder %s71, %s73
      %p80 = scmp.eq.s32.totalorder %s21, 1
      %p81 = por %p79, %p80
      %p82 = scmp.ne.s32.totalorder %s73, %s74
      %p83 = scmp.eq.s32.totalorder %s21, 0
      %p84 = por %p82, %p83
      %p85 = scmp.ne.s32.totalorder %s73, %s74
      %p86 = scmp.eq.s32.totalorder %s22, 1
      %p87 = por %p85, %p86
      %p89 = scmp.ne.s32.totalorder %s74, %s88
      %p90 = scmp.eq.s32.totalorder %s22, 0
      %p91 = por %p89, %p90
      %s93 = sadd.s32 %s92, 1
      %p96 = scmp.eq.s32.totalorder %s16, 1
      %p97 = scmp.ne.s32.totalorder %s92, %s94
      %p98 = scmp.eq.s32.totalorder %s16, 0
      %p99 = por %p97, %p98
      %p100 = scmp.ne.s32.totalorder %s92, %s94
      %p101 = scmp.eq.s32.totalorder %s21, 1
      %p102 = por %p100, %p101
      %p103 = scmp.ne.s32.totalorder %s94, %s95
      %p104 = scmp.eq.s32.totalorder %s21, 0
      %p105 = por %p103, %p104
      %p106 = scmp.ne.s32.totalorder %s94, %s95
      %p107 = scmp.eq.s32.totalorder %s22, 1
      %p108 = por %p106, %p107
      %p110 = scmp.ne.s32.totalorder %s95, %s109
      %p111 = scmp.eq.s32.totalorder %s22, 0
      %p112 = por %p110, %p111
      %s114 = sadd.s32 %s113, 1
      %p117 = scmp.eq.s32.totalorder %s16, 1
      %p118 = scmp.ne.s32.totalorder %s113, %s115
      %p119 = scmp.eq.s32.totalorder %s16, 0
      %p120 = por %p118, %p119
      %p121 = scmp.ne.s32.totalorder %s113, %s115
      %p122 = scmp.eq.s32.totalorder %s21, 1
      %p123 = por %p121, %p122
      %p124 = scmp.ne.s32.totalorder %s115, %s116
      %p125 = scmp.eq.s32.totalorder %s21, 0
      %p126 = por %p124, %p125
      %p127 = scmp.ne.s32.totalorder %s115, %s116
      %p128 = scmp.eq.s32.totalorder %s22, 1
      %p129 = por %p127, %p128
      %p131 = scmp.ne.s32.totalorder %s116, %s130
      %p132 = scmp.eq.s32.totalorder %s22, 0
      %p133 = por %p131, %p132
      %s135 = sadd.s32 %s134, 1
      %p138 = scmp.eq.s32.totalorder %s16, 1
      %p139 = scmp.ne.s32.totalorder %s134, %s136
      %p140 = scmp.eq.s32.totalorder %s16, 0
      %p141 = por %p139, %p140
      %p142 = scmp.ne.s32.totalorder %s134, %s136
      %p143 = scmp.eq.s32.totalorder %s21, 1
      %p144 = por %p142, %p143
      %p145 = scmp.ne.s32.totalorder %s136, %s137
      %p146 = scmp.eq.s32.totalorder %s21, 0
      %p147 = por %p145, %p146
      %p148 = scmp.ne.s32.totalorder %s136, %s137
      %p149 = scmp.eq.s32.totalorder %s22, 1
      %p150 = por %p148, %p149
      %p152 = scmp.ne.s32.totalorder %s137, %s151
      %p153 = scmp.eq.s32.totalorder %s22, 0
      %p154 = por %p152, %p153
      %s156 = sadd.s32 %s155, 1
      %p159 = scmp.eq.s32.totalorder %s16, 1
      %p160 = scmp.ne.s32.totalorder %s155, %s157
      %p161 = scmp.eq.s32.totalorder %s16, 0
      %p162 = por %p160, %p161
      %p163 = scmp.ne.s32.totalorder %s155, %s157
      %p164 = scmp.eq.s32.totalorder %s21, 1
      %p165 = por %p163, %p164
      %p166 = scmp.ne.s32.totalorder %s157, %s158
      %p167 = scmp.eq.s32.totalorder %s21, 0
      %p168 = por %p166, %p167
      %p169 = scmp.ne.s32.totalorder %s157, %s158
      %p170 = scmp.eq.s32.totalorder %s22, 1
      %p171 = por %p169, %p170
      %p173 = scmp.ne.s32.totalorder %s158, %s172
      %p174 = scmp.eq.s32.totalorder %s22, 0
      %p175 = por %p173, %p174
      %s176 = ssub.s32 %s16, %s23
      %p177 = scmp.eq.s32.totalorder %s176, 0
      %s179 = sadd.s32 %s178, 1
      %s180 = scalar_select %p177, %s178, %s179
      %p183 = pneg %p177
      %p184 = scmp.eq.s32.totalorder %s16, 1
      %p185 = por %p183, %p184
      %p186 = scmp.ne.s32.totalorder %s178, %s181
      %p187 = scmp.eq.s32.totalorder %s16, 0
      %p188 = por %p186, %p187
      %p189 = scmp.ne.s32.totalorder %s178, %s181
      %p190 = scmp.eq.s32.totalorder %s21, 1
      %p191 = por %p189, %p190
      %p192 = scmp.ne.s32.totalorder %s181, %s182
      %p193 = scmp.eq.s32.totalorder %s21, 0
      %p194 = por %p192, %p193
      %p195 = scmp.ne.s32.totalorder %s181, %s182
      %p196 = scmp.eq.s32.totalorder %s22, 1
      %p197 = por %p195, %p196
      %p199 = scmp.ne.s32.totalorder %s182, %s198
      %p200 = scmp.eq.s32.totalorder %s22, 0
      %p201 = por %p199, %p200
      %p202 = scmp.le.s32.totalorder 1, %s16
      %p203 = scmp.lt.s32.totalorder %s16, 3
      %p204 = pnand %p202, %p203
      %p205 = pneg %p204
      // Predicated region
      $region9: #{mymodel_forward.1} parent=5 // pred_check
        _
      $region10: #{mymodel_forward.1} parent=5 // pred_check_branch
        %207 = sbr.rel (%p204) target = $region12
      $region11: #{mymodel_forward.1} parent=5 // pred_region
        %s208 = ssub.s32 %s16, 1
        // Predicated region
        $region13: #{mymodel_forward.1} parent=11 // pred_check
          %p209 = pneg %p63
        $region14: #{mymodel_forward.1} parent=11 // pred_check_branch
          %211 = sbr.rel (%p209) target = $region16
        $region15: #{mymodel_forward.1} parent=11 // pred_region
          _
        $region16: #{mymodel_forward.1} parent=11 // pred_fallthru
          _
        // Predicated region
        $region17: #{mymodel_forward.1} parent=11 // pred_check
          %p212 = pneg %p84
        $region18: #{mymodel_forward.1} parent=11 // pred_check_branch
          %214 = sbr.rel (%p212) target = $region20
        $region19: #{mymodel_forward.1} parent=11 // pred_region
          _
        $region20: #{mymodel_forward.1} parent=11 // pred_fallthru
          _
        // Predicated region
        $region21: #{mymodel_forward.1} parent=11 // pred_check
          %p215 = pneg %p105
        $region22: #{mymodel_forward.1} parent=11 // pred_check_branch
          %217 = sbr.rel (%p215) target = $region24
        $region23: #{mymodel_forward.1} parent=11 // pred_region
          _
        $region24: #{mymodel_forward.1} parent=11 // pred_fallthru
          _
        // Predicated region
        $region25: #{mymodel_forward.1} parent=11 // pred_check
          %p218 = pneg %p126
        $region26: #{mymodel_forward.1} parent=11 // pred_check_branch
          %220 = sbr.rel (%p218) target = $region28
        $region27: #{mymodel_forward.1} parent=11 // pred_region
          _
        $region28: #{mymodel_forward.1} parent=11 // pred_fallthru
          _
        // Predicated region
        $region29: #{mymodel_forward.1} parent=11 // pred_check
          %p221 = pneg %p147
        $region30: #{mymodel_forward.1} parent=11 // pred_check_branch
          %223 = sbr.rel (%p221) target = $region32
        $region31: #{mymodel_forward.1} parent=11 // pred_region
          _
        $region32: #{mymodel_forward.1} parent=11 // pred_fallthru
          _
        // Predicated region
        $region33: #{mymodel_forward.1} parent=11 // pred_check
          %p224 = pneg %p168
        $region34: #{mymodel_forward.1} parent=11 // pred_check_branch
          %226 = sbr.rel (%p224) target = $region36
        $region35: #{mymodel_forward.1} parent=11 // pred_region
          _
        $region36: #{mymodel_forward.1} parent=11 // pred_fallthru
          _
      $region12: #{mymodel_forward.1} parent=5 // pred_fallthru
        _
      %p227 = scmp.lt.s32.totalorder %s16, 2
      // Predicated region
      $region37: #{mymodel_forward.1} parent=5 // pred_check
        %p228 = pneg %p227
      $region38: #{mymodel_forward.1} parent=5 // pred_check_branch
        %230 = sbr.rel (%p228) target = $region40
      $region39: #{mymodel_forward.1} parent=5 // pred_region
        // Predicated region
        $region41: #{mymodel_forward.1} parent=39 // pred_check
          %p231 = pneg %p36
        $region42: #{mymodel_forward.1} parent=39 // pred_check_branch
          %233 = sbr.rel (%p231) target = $region44
        $region43: #{mymodel_forward.1} parent=39 // pred_region
          %p234 = scmp.lt.s32.totalorder %s16, 1
          %s235 = scalar_select %p234, %s16, 1
          %s236 = smul.addr %s235, 13
          %s237 = smul.addr %s236, 8
          %s238 = scalar_lea.vmem %s0, %s237
        $region44: #{mymodel_forward.1} parent=39 // pred_fallthru
          _
      $region40: #{mymodel_forward.1} parent=5 // pred_fallthru
        _
      %p239 = scmp.le.s32.totalorder 1, %s16
      %p240 = scmp.lt.s32.totalorder %s16, 3
      %p241 = pnand %p239, %p240
      %p242 = pneg %p241
      // Predicated region
      $region45: #{mymodel_forward.1} parent=5 // pred_check
        _
      $region46: #{mymodel_forward.1} parent=5 // pred_check_branch
        %244 = sbr.rel (%p241) target = $region48
      $region47: #{mymodel_forward.1} parent=5 // pred_region
        %s245 = ssub.s32 %s16, 1
        %p246 = scmp.lt.s32.totalorder %s21, 1
        %s247 = scalar_select %p246, %s21, 1
        %s248 = smul.addr %s247, 13
        %s249 = smul.addr %s248, 8
        %s250 = scalar_lea.vmem %s0, %s249
        %p251 = pneg %p42
        %p252 = pneg %p39
        %p253 = pneg %p63
        %p254 = pneg %p60
        %p255 = pneg %p84
        %p256 = pneg %p81
        %p257 = pneg %p105
        %p258 = pneg %p102
        %p259 = pneg %p126
        %p260 = pneg %p123
        %p261 = pneg %p147
        %p262 = pneg %p144
        %p263 = pneg %p168
        %p264 = pneg %p165
        %p265 = pneg %p194
        %p266 = pneg %p191
        %s267 = sand.u32 %s181, 1
        %s268 = scalar_lea.sflag [#allocation3], %s267
        %s269 = sand.u32 %s181, 1
        %s270 = scalar_lea.vmem [#allocation2], %s269
        %p271 = scmp.lt.s32.totalorder %s21, 1
        %s272 = scalar_select %p271, %s21, 1
        %s273 = smul.addr %s272, 13
        %s274 = smul.addr %s273, 8
        %s275 = scalar_lea.vmem %s0, %s274
        %v276 = vld [vmem:[%s275] sm:$0xff]
        %v277 = vld [vmem:[%s275 + $0x8] sm:$0xff]
        %v278 = vld [vmem:[%s275 + $0x10] sm:$0xff]
        %v279 = vld [vmem:[%s275 + $0x18] sm:$0xff]
        %v280 = vld [vmem:[%s275 + $0x20] sm:$0xff]
        %v281 = vld [vmem:[%s275 + $0x28] sm:$0xff]
        %v282 = vld [vmem:[%s275 + $0x30] sm:$0xff]
        %v283 = vld [vmem:[%s275 + $0x38] sm:$0xff]
        %v284 = vld [vmem:[%s275 + $0x40] sm:$0xff]
        %v285 = vld [vmem:[%s275 + $0x48] sm:$0xff]
        %v286 = vld [vmem:[%s275 + $0x50] sm:$0xff]
        %v287 = vld [vmem:[%s275 + $0x58] sm:$0xff]
        %v288 = vld [vmem:[%s275 + $0x60] sm:$0xf]
        %v289 = vld [vmem:[%s1] sm:$0x1f]
        %v290 = vld [vmem:[%s2] sm:$0x1f]
        %292 = vset.pattern.permute.xlu0 0
        %293 = vperm.xlu0 %292, %v290
        %v294 = vpop.permute.xlu0 %293
        %vm296 = vcmask 818176
        %v298 = vsel %vm296, %v289, 0
        %vm300 = vcmask 1043456
        %v302 = vsel %vm300, %v288, 0
        %304 = vmatprep.subr.mxu0 0.0
        %305 = vmatpush1.msra.mxu0 0.0
        %306 = vmatprep.subr.mxu0 0.0
        %307 = vmatpush1.msra.mxu0 0.0
        %308 = vmatprep.subr.mxu0 0.0
        %309 = vmatpush1.msra.mxu0 0.0
        %310 = vmatprep.subr.mxu0 0.0
        %311 = vmatpush1.msra.mxu0 %v302
        %312 = vmatprep.subr.mxu0 0.0
        %313 = vmatpush1.msra.mxu0 %v287
        %314 = vmatprep.subr.mxu0 0.0
        %315 = vmatpush1.msra.mxu0 %v286
        %316 = vmatprep.subr.mxu0 0.0
        %317 = vmatpush1.msra.mxu0 %v285
        %318 = vmatprep.subr.mxu0 0.0
        %319 = vmatpush1.msra.mxu0 %v284
        %320 = vmatprep.subr.mxu0 0.0
        %321 = vmatpush1.msra.mxu0 %v283
        %322 = vmatprep.subr.mxu0 0.0
        %323 = vmatpush1.msra.mxu0 %v282
        %324 = vmatprep.subr.mxu0 0.0
        %325 = vmatpush1.msra.mxu0 %v281
        %326 = vmatprep.subr.mxu0 0.0
        %327 = vmatpush1.msra.mxu0 %v280
        %328 = vmatprep.subr.mxu0 0.0
        %329 = vmatpush1.msra.mxu0 %v279
        %330 = vmatprep.subr.mxu0 0.0
        %331 = vmatpush1.msra.mxu0 %v278
        %332 = vmatprep.subr.mxu0 0.0
        %333 = vmatpush1.msra.mxu0 %v277
        %334 = vmatprep.subr.mxu0 0.0
        %335 = vmatpush1.msra.mxu0 %v276
        %336 = vmatprep.subr.mxu0 0.0
        %337 = vmatpush2.msra.mxu0 0.0
        %338 = vmatprep.subr.mxu0 0.0
        %339 = vmatpush2.msra.mxu0 0.0
        %340 = vmatprep.subr.mxu0 0.0
        %341 = vmatpush2.msra.mxu0 0.0
        %342 = vmatprep.subr.mxu0 0.0
        %343 = vmatpush2.msra.mxu0 0.0
        %344 = vmatprep.subr.mxu0 0.0
        %345 = vmatpush2.msra.mxu0 0.0
        %346 = vmatprep.subr.mxu0 0.0
        %347 = vmatpush2.msra.mxu0 0.0
        %348 = vmatprep.subr.mxu0 0.0
        %349 = vmatpush2.msra.mxu0 0.0
        %350 = vmatprep.subr.mxu0 0.0
        %351 = vmatpush2.msra.mxu0 0.0
        %352 = vmatprep.subr.mxu0 0.0
        %353 = vmatpush2.msra.mxu0 0.0
        %354 = vmatprep.subr.mxu0 0.0
        %355 = vmatpush2.msra.mxu0 0.0
        %356 = vmatprep.subr.mxu0 0.0
        %357 = vmatpush2.msra.mxu0 0.0
        %358 = vmatprep.subr.mxu0 0.0
        %359 = vmatpush2.msra.mxu0 0.0
        %360 = vmatprep.subr.mxu0 0.0
        %361 = vmatpush2.msra.mxu0 0.0
        %362 = vmatprep.subr.mxu0 0.0
        %363 = vmatpush2.msra.mxu0 0.0
        %364 = vmatprep.subr.mxu0 0.0
        %365 = vmatpush2.msra.mxu0 0.0
        %366 = vmatprep.subr.mxu0 0.0
        %367 = vmatpush2.msra.mxu0 0.0
        %368 = vmatprep.mubr.f32.mxu0 0.0
        %369 = vmatmul.mubr.f32.gmra.mxu0 %v298
        %v370 = vpop.f32.mrf.mxu0
        %v371 = vadd.f32 %v294, %v370
        %v372 = vpop.f32.mrf.mxu0
        %373 = vdwg.mxu0
        %v374 = vmax.f32 %v371, 0.0
        %v375 = vld [vmem:[%s4] sm:$0x1]
        %v376 = vld [vmem:[%s3] sm:$0xff]
        %v377 = vld [vmem:[%s3 + $0x8] sm:$0xff]
        %v378 = vld [vmem:[%s3 + $0x10] sm:$0xff]
        %v379 = vld [vmem:[%s3 + $0x18] sm:$0xff]
        %v380 = vld [vmem:[%s3 + $0x20] sm:$0xff]
        %v381 = vld [vmem:[%s3 + $0x28] sm:$0xff]
        %v382 = vld [vmem:[%s3 + $0x30] sm:$0x1]
        %vm383 = vcmask 400384
        %v385 = vsel %vm383, %v374, 0
        %vm387 = vcmask 1040384
        %v389 = vsel %vm387, %v382, 0
        %391 = vmatprep.subr.mxu0 0.0
        %392 = vmatpush1.msra.mxu0 0.0
        %393 = vmatprep.subr.mxu0 0.0
        %394 = vmatpush1.msra.mxu0 0.0
        %395 = vmatprep.subr.mxu0 0.0
        %396 = vmatpush1.msra.mxu0 0.0
        %397 = vmatprep.subr.mxu0 0.0
        %398 = vmatpush1.msra.mxu0 0.0
        %399 = vmatprep.subr.mxu0 0.0
        %400 = vmatpush1.msra.mxu0 0.0
        %401 = vmatprep.subr.mxu0 0.0
        %402 = vmatpush1.msra.mxu0 0.0
        %403 = vmatprep.subr.mxu0 0.0
        %404 = vmatpush1.msra.mxu0 0.0
        %405 = vmatprep.subr.mxu0 0.0
        %406 = vmatpush1.msra.mxu0 0.0
        %407 = vmatprep.subr.mxu0 0.0
        %408 = vmatpush1.msra.mxu0 0.0
        %409 = vmatprep.subr.mxu0 0.0
        %410 = vmatpush1.msra.mxu0 %v389
        %411 = vmatprep.subr.mxu0 0.0
        %412 = vmatpush1.msra.mxu0 %v381
        %413 = vmatprep.subr.mxu0 0.0
        %414 = vmatpush1.msra.mxu0 %v380
        %415 = vmatprep.subr.mxu0 0.0
        %416 = vmatpush1.msra.mxu0 %v379
        %417 = vmatprep.subr.mxu0 0.0
        %418 = vmatpush1.msra.mxu0 %v378
        %419 = vmatprep.subr.mxu0 0.0
        %420 = vmatpush1.msra.mxu0 %v377
        %421 = vmatprep.subr.mxu0 0.0
        %422 = vmatpush1.msra.mxu0 %v376
        %423 = vmatprep.subr.mxu0 0.0
        %424 = vmatpush2.msra.mxu0 0.0
        %425 = vmatprep.subr.mxu0 0.0
        %426 = vmatpush2.msra.mxu0 0.0
        %427 = vmatprep.subr.mxu0 0.0
        %428 = vmatpush2.msra.mxu0 0.0
        %429 = vmatprep.subr.mxu0 0.0
        %430 = vmatpush2.msra.mxu0 0.0
        %431 = vmatprep.subr.mxu0 0.0
        %432 = vmatpush2.msra.mxu0 0.0
        %433 = vmatprep.subr.mxu0 0.0
        %434 = vmatpush2.msra.mxu0 0.0
        %435 = vmatprep.subr.mxu0 0.0
        %436 = vmatpush2.msra.mxu0 0.0
        %437 = vmatprep.subr.mxu0 0.0
        %438 = vmatpush2.msra.mxu0 0.0
        %439 = vmatprep.subr.mxu0 0.0
        %440 = vmatpush2.msra.mxu0 0.0
        %441 = vmatprep.subr.mxu0 0.0
        %442 = vmatpush2.msra.mxu0 0.0
        %443 = vmatprep.subr.mxu0 0.0
        %444 = vmatpush2.msra.mxu0 0.0
        %445 = vmatprep.subr.mxu0 0.0
        %446 = vmatpush2.msra.mxu0 0.0
        %447 = vmatprep.subr.mxu0 0.0
        %448 = vmatpush2.msra.mxu0 0.0
        %449 = vmatprep.subr.mxu0 0.0
        %450 = vmatpush2.msra.mxu0 0.0
        %451 = vmatprep.subr.mxu0 0.0
        %452 = vmatpush2.msra.mxu0 0.0
        %453 = vmatprep.subr.mxu0 0.0
        %454 = vmatpush2.msra.mxu0 0.0
        %455 = vmatprep.mubr.f32.mxu0 0.0
        %456 = vmatmul.mubr.f32.gmra.mxu0 %v385
        %v457 = vpop.f32.mrf.mxu0
        %v458 = vadd.f32 0.0, %v457
        %v459 = vpop.f32.mrf.mxu0
        %460 = vdwg.mxu0
        %v461 = vadd.f32 %v375, %v458
        %s462 = scalar_lea.vmem %s3, 56
        %v463 = vld [vmem:[%s462] sm:$0xff]
        %v464 = vld [vmem:[%s462 + $0x8] sm:$0xff]
        %v465 = vld [vmem:[%s462 + $0x10] sm:$0xff]
        %v466 = vld [vmem:[%s462 + $0x18] sm:$0xff]
        %v467 = vld [vmem:[%s462 + $0x20] sm:$0xff]
        %v468 = vld [vmem:[%s462 + $0x28] sm:$0xff]
        %v469 = vld [vmem:[%s462 + $0x30] sm:$0x1]
        %v470 = vrot.slane %v374, 1
        %v471 = vsel %vm383, %v470, 0
        %v474 = vsel %vm387, %v469, 0
        %476 = vmatprep.subr.mxu0 0.0
        %477 = vmatpush1.msra.mxu0 0.0
        %478 = vmatprep.subr.mxu0 0.0
        %479 = vmatpush1.msra.mxu0 0.0
        %480 = vmatprep.subr.mxu0 0.0
        %481 = vmatpush1.msra.mxu0 0.0
        %482 = vmatprep.subr.mxu0 0.0
        %483 = vmatpush1.msra.mxu0 0.0
        %484 = vmatprep.subr.mxu0 0.0
        %485 = vmatpush1.msra.mxu0 0.0
        %486 = vmatprep.subr.mxu0 0.0
        %487 = vmatpush1.msra.mxu0 0.0
        %488 = vmatprep.subr.mxu0 0.0
        %489 = vmatpush1.msra.mxu0 0.0
        %490 = vmatprep.subr.mxu0 0.0
        %491 = vmatpush1.msra.mxu0 0.0
        %492 = vmatprep.subr.mxu0 0.0
        %493 = vmatpush1.msra.mxu0 0.0
        %494 = vmatprep.subr.mxu0 0.0
        %495 = vmatpush1.msra.mxu0 %v474
        %496 = vmatprep.subr.mxu0 0.0
        %497 = vmatpush1.msra.mxu0 %v468
        %498 = vmatprep.subr.mxu0 0.0
        %499 = vmatpush1.msra.mxu0 %v467
        %500 = vmatprep.subr.mxu0 0.0
        %501 = vmatpush1.msra.mxu0 %v466
        %502 = vmatprep.subr.mxu0 0.0
        %503 = vmatpush1.msra.mxu0 %v465
        %504 = vmatprep.subr.mxu0 0.0
        %505 = vmatpush1.msra.mxu0 %v464
        %506 = vmatprep.subr.mxu0 0.0
        %507 = vmatpush1.msra.mxu0 %v463
        %508 = vmatprep.subr.mxu0 0.0
        %509 = vmatpush2.msra.mxu0 0.0
        %510 = vmatprep.subr.mxu0 0.0
        %511 = vmatpush2.msra.mxu0 0.0
        %512 = vmatprep.subr.mxu0 0.0
        %513 = vmatpush2.msra.mxu0 0.0
        %514 = vmatprep.subr.mxu0 0.0
        %515 = vmatpush2.msra.mxu0 0.0
        %516 = vmatprep.subr.mxu0 0.0
        %517 = vmatpush2.msra.mxu0 0.0
        %518 = vmatprep.subr.mxu0 0.0
        %519 = vmatpush2.msra.mxu0 0.0
        %520 = vmatprep.subr.mxu0 0.0
        %521 = vmatpush2.msra.mxu0 0.0
        %522 = vmatprep.subr.mxu0 0.0
        %523 = vmatpush2.msra.mxu0 0.0
        %524 = vmatprep.subr.mxu0 0.0
        %525 = vmatpush2.msra.mxu0 0.0
        %526 = vmatprep.subr.mxu0 0.0
        %527 = vmatpush2.msra.mxu0 0.0
        %528 = vmatprep.subr.mxu0 0.0
        %529 = vmatpush2.msra.mxu0 0.0
        %530 = vmatprep.subr.mxu0 0.0
        %531 = vmatpush2.msra.mxu0 0.0
        %532 = vmatprep.subr.mxu0 0.0
        %533 = vmatpush2.msra.mxu0 0.0
        %534 = vmatprep.subr.mxu0 0.0
        %535 = vmatpush2.msra.mxu0 0.0
        %536 = vmatprep.subr.mxu0 0.0
        %537 = vmatpush2.msra.mxu0 0.0
        %538 = vmatprep.subr.mxu0 0.0
        %539 = vmatpush2.msra.mxu0 0.0
        %540 = vmatprep.mubr.f32.mxu0 0.0
        %541 = vmatmul.mubr.f32.gmra.mxu0 %v471
        %v542 = vpop.f32.mrf.mxu0
        %v543 = vadd.f32 0.0, %v542
        %v544 = vpop.f32.mrf.mxu0
        %545 = vdwg.mxu0
        %v546 = vadd.f32 %v461, %v543
        %s547 = scalar_lea.vmem %s3, 112
        %v548 = vld [vmem:[%s547] sm:$0xff]
        %v549 = vld [vmem:[%s547 + $0x8] sm:$0xff]
        %v550 = vld [vmem:[%s547 + $0x10] sm:$0xff]
        %v551 = vld [vmem:[%s547 + $0x18] sm:$0xff]
        %v552 = vld [vmem:[%s547 + $0x20] sm:$0xff]
        %v553 = vld [vmem:[%s547 + $0x28] sm:$0xff]
        %v554 = vld [vmem:[%s547 + $0x30] sm:$0x1]
        %v555 = vrot.slane %v374, 2
        %v556 = vsel %vm383, %v555, 0
        %v559 = vsel %vm387, %v554, 0
        %561 = vmatprep.subr.mxu0 0.0
        %562 = vmatpush1.msra.mxu0 0.0
        %563 = vmatprep.subr.mxu0 0.0
        %564 = vmatpush1.msra.mxu0 0.0
        %565 = vmatprep.subr.mxu0 0.0
        %566 = vmatpush1.msra.mxu0 0.0
        %567 = vmatprep.subr.mxu0 0.0
        %568 = vmatpush1.msra.mxu0 0.0
        %569 = vmatprep.subr.mxu0 0.0
        %570 = vmatpush1.msra.mxu0 0.0
        %571 = vmatprep.subr.mxu0 0.0
        %572 = vmatpush1.msra.mxu0 0.0
        %573 = vmatprep.subr.mxu0 0.0
        %574 = vmatpush1.msra.mxu0 0.0
        %575 = vmatprep.subr.mxu0 0.0
        %576 = vmatpush1.msra.mxu0 0.0
        %577 = vmatprep.subr.mxu0 0.0
        %578 = vmatpush1.msra.mxu0 0.0
        %579 = vmatprep.subr.mxu0 0.0
        %580 = vmatpush1.msra.mxu0 %v559
        %581 = vmatprep.subr.mxu0 0.0
        %582 = vmatpush1.msra.mxu0 %v553
        %583 = vmatprep.subr.mxu0 0.0
        %584 = vmatpush1.msra.mxu0 %v552
        %585 = vmatprep.subr.mxu0 0.0
        %586 = vmatpush1.msra.mxu0 %v551
        %587 = vmatprep.subr.mxu0 0.0
        %588 = vmatpush1.msra.mxu0 %v550
        %589 = vmatprep.subr.mxu0 0.0
        %590 = vmatpush1.msra.mxu0 %v549
        %591 = vmatprep.subr.mxu0 0.0
        %592 = vmatpush1.msra.mxu0 %v548
        %593 = vmatprep.subr.mxu0 0.0
        %594 = vmatpush2.msra.mxu0 0.0
        %595 = vmatprep.subr.mxu0 0.0
        %596 = vmatpush2.msra.mxu0 0.0
        %597 = vmatprep.subr.mxu0 0.0
        %598 = vmatpush2.msra.mxu0 0.0
        %599 = vmatprep.subr.mxu0 0.0
        %600 = vmatpush2.msra.mxu0 0.0
        %601 = vmatprep.subr.mxu0 0.0
        %602 = vmatpush2.msra.mxu0 0.0
        %603 = vmatprep.subr.mxu0 0.0
        %604 = vmatpush2.msra.mxu0 0.0
        %605 = vmatprep.subr.mxu0 0.0
        %606 = vmatpush2.msra.mxu0 0.0
        %607 = vmatprep.subr.mxu0 0.0
        %608 = vmatpush2.msra.mxu0 0.0
        %609 = vmatprep.subr.mxu0 0.0
        %610 = vmatpush2.msra.mxu0 0.0
        %611 = vmatprep.subr.mxu0 0.0
        %612 = vmatpush2.msra.mxu0 0.0
        %613 = vmatprep.subr.mxu0 0.0
        %614 = vmatpush2.msra.mxu0 0.0
        %615 = vmatprep.subr.mxu0 0.0
        %616 = vmatpush2.msra.mxu0 0.0
        %617 = vmatprep.subr.mxu0 0.0
        %618 = vmatpush2.msra.mxu0 0.0
        %619 = vmatprep.subr.mxu0 0.0
        %620 = vmatpush2.msra.mxu0 0.0
        %621 = vmatprep.subr.mxu0 0.0
        %622 = vmatpush2.msra.mxu0 0.0
        %623 = vmatprep.subr.mxu0 0.0
        %624 = vmatpush2.msra.mxu0 0.0
        %625 = vmatprep.mubr.f32.mxu0 0.0
        %626 = vmatmul.mubr.f32.gmra.mxu0 %v556
        %v627 = vpop.f32.mrf.mxu0
        %v628 = vadd.f32 0.0, %v627
        %v629 = vpop.f32.mrf.mxu0
        %630 = vdwg.mxu0
        %v631 = vadd.f32 %v546, %v628
        %s632 = scalar_lea.vmem %s3, 168
        %v633 = vld [vmem:[%s632] sm:$0xff]
        %v634 = vld [vmem:[%s632 + $0x8] sm:$0xff]
        %v635 = vld [vmem:[%s632 + $0x10] sm:$0xff]
        %v636 = vld [vmem:[%s632 + $0x18] sm:$0xff]
        %v637 = vld [vmem:[%s632 + $0x20] sm:$0xff]
        %v638 = vld [vmem:[%s632 + $0x28] sm:$0xff]
        %v639 = vld [vmem:[%s632 + $0x30] sm:$0x1]
        %v640 = vrot.slane %v374, 3
        %v641 = vsel %vm383, %v640, 0
        %v644 = vsel %vm387, %v639, 0
        %646 = vmatprep.subr.mxu0 0.0
        %647 = vmatpush1.msra.mxu0 0.0
        %648 = vmatprep.subr.mxu0 0.0
        %649 = vmatpush1.msra.mxu0 0.0
        %650 = vmatprep.subr.mxu0 0.0
        %651 = vmatpush1.msra.mxu0 0.0
        %652 = vmatprep.subr.mxu0 0.0
        %653 = vmatpush1.msra.mxu0 0.0
        %654 = vmatprep.subr.mxu0 0.0
        %655 = vmatpush1.msra.mxu0 0.0
        %656 = vmatprep.subr.mxu0 0.0
        %657 = vmatpush1.msra.mxu0 0.0
        %658 = vmatprep.subr.mxu0 0.0
        %659 = vmatpush1.msra.mxu0 0.0
        %660 = vmatprep.subr.mxu0 0.0
        %661 = vmatpush1.msra.mxu0 0.0
        %662 = vmatprep.subr.mxu0 0.0
        %663 = vmatpush1.msra.mxu0 0.0
        %664 = vmatprep.subr.mxu0 0.0
        %665 = vmatpush1.msra.mxu0 %v644
        %666 = vmatprep.subr.mxu0 0.0
        %667 = vmatpush1.msra.mxu0 %v638
        %668 = vmatprep.subr.mxu0 0.0
        %669 = vmatpush1.msra.mxu0 %v637
        %670 = vmatprep.subr.mxu0 0.0
        %671 = vmatpush1.msra.mxu0 %v636
        %672 = vmatprep.subr.mxu0 0.0
        %673 = vmatpush1.msra.mxu0 %v635
        %674 = vmatprep.subr.mxu0 0.0
        %675 = vmatpush1.msra.mxu0 %v634
        %676 = vmatprep.subr.mxu0 0.0
        %677 = vmatpush1.msra.mxu0 %v633
        %678 = vmatprep.subr.mxu0 0.0
        %679 = vmatpush2.msra.mxu0 0.0
        %680 = vmatprep.subr.mxu0 0.0
        %681 = vmatpush2.msra.mxu0 0.0
        %682 = vmatprep.subr.mxu0 0.0
        %683 = vmatpush2.msra.mxu0 0.0
        %684 = vmatprep.subr.mxu0 0.0
        %685 = vmatpush2.msra.mxu0 0.0
        %686 = vmatprep.subr.mxu0 0.0
        %687 = vmatpush2.msra.mxu0 0.0
        %688 = vmatprep.subr.mxu0 0.0
        %689 = vmatpush2.msra.mxu0 0.0
        %690 = vmatprep.subr.mxu0 0.0
        %691 = vmatpush2.msra.mxu0 0.0
        %692 = vmatprep.subr.mxu0 0.0
        %693 = vmatpush2.msra.mxu0 0.0
        %694 = vmatprep.subr.mxu0 0.0
        %695 = vmatpush2.msra.mxu0 0.0
        %696 = vmatprep.subr.mxu0 0.0
        %697 = vmatpush2.msra.mxu0 0.0
        %698 = vmatprep.subr.mxu0 0.0
        %699 = vmatpush2.msra.mxu0 0.0
        %700 = vmatprep.subr.mxu0 0.0
        %701 = vmatpush2.msra.mxu0 0.0
        %702 = vmatprep.subr.mxu0 0.0
        %703 = vmatpush2.msra.mxu0 0.0
        %704 = vmatprep.subr.mxu0 0.0
        %705 = vmatpush2.msra.mxu0 0.0
        %706 = vmatprep.subr.mxu0 0.0
        %707 = vmatpush2.msra.mxu0 0.0
        %708 = vmatprep.subr.mxu0 0.0
        %709 = vmatpush2.msra.mxu0 0.0
        %710 = vmatprep.mubr.f32.mxu0 0.0
        %711 = vmatmul.mubr.f32.gmra.mxu0 %v641
        %v712 = vpop.f32.mrf.mxu0
        %v713 = vadd.f32 0.0, %v712
        %v714 = vpop.f32.mrf.mxu0
        %715 = vdwg.mxu0
        %v716 = vadd.f32 %v631, %v713
        %s717 = scalar_lea.vmem %s3, 224
        %v718 = vld [vmem:[%s717] sm:$0xff]
        %v719 = vld [vmem:[%s717 + $0x8] sm:$0xff]
        %v720 = vld [vmem:[%s717 + $0x10] sm:$0xff]
        %v721 = vld [vmem:[%s717 + $0x18] sm:$0xff]
        %v722 = vld [vmem:[%s717 + $0x20] sm:$0xff]
        %v723 = vld [vmem:[%s717 + $0x28] sm:$0xff]
        %v724 = vld [vmem:[%s717 + $0x30] sm:$0x1]
        %v725 = vrot.slane %v374, 4
        %v726 = vsel %vm383, %v725, 0
        %v729 = vsel %vm387, %v724, 0
        %731 = vmatprep.subr.mxu0 0.0
        %732 = vmatpush1.msra.mxu0 0.0
        %733 = vmatprep.subr.mxu0 0.0
        %734 = vmatpush1.msra.mxu0 0.0
        %735 = vmatprep.subr.mxu0 0.0
        %736 = vmatpush1.msra.mxu0 0.0
        %737 = vmatprep.subr.mxu0 0.0
        %738 = vmatpush1.msra.mxu0 0.0
        %739 = vmatprep.subr.mxu0 0.0
        %740 = vmatpush1.msra.mxu0 0.0
        %741 = vmatprep.subr.mxu0 0.0
        %742 = vmatpush1.msra.mxu0 0.0
        %743 = vmatprep.subr.mxu0 0.0
        %744 = vmatpush1.msra.mxu0 0.0
        %745 = vmatprep.subr.mxu0 0.0
        %746 = vmatpush1.msra.mxu0 0.0
        %747 = vmatprep.subr.mxu0 0.0
        %748 = vmatpush1.msra.mxu0 0.0
        %749 = vmatprep.subr.mxu0 0.0
        %750 = vmatpush1.msra.mxu0 %v729
        %751 = vmatprep.subr.mxu0 0.0
        %752 = vmatpush1.msra.mxu0 %v723
        %753 = vmatprep.subr.mxu0 0.0
        %754 = vmatpush1.msra.mxu0 %v722
        %755 = vmatprep.subr.mxu0 0.0
        %756 = vmatpush1.msra.mxu0 %v721
        %757 = vmatprep.subr.mxu0 0.0
        %758 = vmatpush1.msra.mxu0 %v720
        %759 = vmatprep.subr.mxu0 0.0
        %760 = vmatpush1.msra.mxu0 %v719
        %761 = vmatprep.subr.mxu0 0.0
        %762 = vmatpush1.msra.mxu0 %v718
        %763 = vmatprep.subr.mxu0 0.0
        %764 = vmatpush2.msra.mxu0 0.0
        %765 = vmatprep.subr.mxu0 0.0
        %766 = vmatpush2.msra.mxu0 0.0
        %767 = vmatprep.subr.mxu0 0.0
        %768 = vmatpush2.msra.mxu0 0.0
        %769 = vmatprep.subr.mxu0 0.0
        %770 = vmatpush2.msra.mxu0 0.0
        %771 = vmatprep.subr.mxu0 0.0
        %772 = vmatpush2.msra.mxu0 0.0
        %773 = vmatprep.subr.mxu0 0.0
        %774 = vmatpush2.msra.mxu0 0.0
        %775 = vmatprep.subr.mxu0 0.0
        %776 = vmatpush2.msra.mxu0 0.0
        %777 = vmatprep.subr.mxu0 0.0
        %778 = vmatpush2.msra.mxu0 0.0
        %779 = vmatprep.subr.mxu0 0.0
        %780 = vmatpush2.msra.mxu0 0.0
        %781 = vmatprep.subr.mxu0 0.0
        %782 = vmatpush2.msra.mxu0 0.0
        %783 = vmatprep.subr.mxu0 0.0
        %784 = vmatpush2.msra.mxu0 0.0
        %785 = vmatprep.subr.mxu0 0.0
        %786 = vmatpush2.msra.mxu0 0.0
        %787 = vmatprep.subr.mxu0 0.0
        %788 = vmatpush2.msra.mxu0 0.0
        %789 = vmatprep.subr.mxu0 0.0
        %790 = vmatpush2.msra.mxu0 0.0
        %791 = vmatprep.subr.mxu0 0.0
        %792 = vmatpush2.msra.mxu0 0.0
        %793 = vmatprep.subr.mxu0 0.0
        %794 = vmatpush2.msra.mxu0 0.0
        %795 = vmatprep.mubr.f32.mxu0 0.0
        %796 = vmatmul.mubr.f32.gmra.mxu0 %v726
        %v797 = vpop.f32.mrf.mxu0
        %v798 = vadd.f32 0.0, %v797
        %v799 = vpop.f32.mrf.mxu0
        %800 = vdwg.mxu0
        %v801 = vadd.f32 %v716, %v798
        %v802 = vmax.f32 %v801, 0.0
        %v803 = vld [vmem:[%s5] sm:$0xff]
        %v804 = vld [vmem:[%s5 + $0x8] sm:$0xff]
        %v805 = vld [vmem:[%s5 + $0x10] sm:$0xff]
        %v806 = vld [vmem:[%s5 + $0x18] sm:$0xff]
        %v807 = vld [vmem:[%s5 + $0x20] sm:$0xff]
        %v808 = vld [vmem:[%s5 + $0x28] sm:$0xff]
        %v809 = vld [vmem:[%s5 + $0x30] sm:$0xff]
        %v810 = vld [vmem:[%s5 + $0x38] sm:$0xff]
        %v811 = vld [vmem:[%s6] sm:$0x1]
        %vm812 = vcmask 523264
        %v814 = vsel %vm812, %v802, 0
        %816 = vmatprep.subr.mxu0 0.0
        %817 = vmatpush1.msra.mxu0 0.0
        %818 = vmatprep.subr.mxu0 0.0
        %819 = vmatpush1.msra.mxu0 0.0
        %820 = vmatprep.subr.mxu0 0.0
        %821 = vmatpush1.msra.mxu0 0.0
        %822 = vmatprep.subr.mxu0 0.0
        %823 = vmatpush1.msra.mxu0 0.0
        %824 = vmatprep.subr.mxu0 0.0
        %825 = vmatpush1.msra.mxu0 0.0
        %826 = vmatprep.subr.mxu0 0.0
        %827 = vmatpush1.msra.mxu0 0.0
        %828 = vmatprep.subr.mxu0 0.0
        %829 = vmatpush1.msra.mxu0 0.0
        %830 = vmatprep.subr.mxu0 0.0
        %831 = vmatpush1.msra.mxu0 0.0
        %832 = vmatprep.subr.mxu0 0.0
        %833 = vmatpush1.msra.mxu0 %v810
        %834 = vmatprep.subr.mxu0 0.0
        %835 = vmatpush1.msra.mxu0 %v809
        %836 = vmatprep.subr.mxu0 0.0
        %837 = vmatpush1.msra.mxu0 %v808
        %838 = vmatprep.subr.mxu0 0.0
        %839 = vmatpush1.msra.mxu0 %v807
        %840 = vmatprep.subr.mxu0 0.0
        %841 = vmatpush1.msra.mxu0 %v806
        %842 = vmatprep.subr.mxu0 0.0
        %843 = vmatpush1.msra.mxu0 %v805
        %844 = vmatprep.subr.mxu0 0.0
        %845 = vmatpush1.msra.mxu0 %v804
        %846 = vmatprep.subr.mxu0 0.0
        %847 = vmatpush1.msra.mxu0 %v803
        %848 = vmatprep.subr.mxu0 0.0
        %849 = vmatpush2.msra.mxu0 0.0
        %850 = vmatprep.subr.mxu0 0.0
        %851 = vmatpush2.msra.mxu0 0.0
        %852 = vmatprep.subr.mxu0 0.0
        %853 = vmatpush2.msra.mxu0 0.0
        %854 = vmatprep.subr.mxu0 0.0
        %855 = vmatpush2.msra.mxu0 0.0
        %856 = vmatprep.subr.mxu0 0.0
        %857 = vmatpush2.msra.mxu0 0.0
        %858 = vmatprep.subr.mxu0 0.0
        %859 = vmatpush2.msra.mxu0 0.0
        %860 = vmatprep.subr.mxu0 0.0
        %861 = vmatpush2.msra.mxu0 0.0
        %862 = vmatprep.subr.mxu0 0.0
        %863 = vmatpush2.msra.mxu0 0.0
        %864 = vmatprep.subr.mxu0 0.0
        %865 = vmatpush2.msra.mxu0 0.0
        %866 = vmatprep.subr.mxu0 0.0
        %867 = vmatpush2.msra.mxu0 0.0
        %868 = vmatprep.subr.mxu0 0.0
        %869 = vmatpush2.msra.mxu0 0.0
        %870 = vmatprep.subr.mxu0 0.0
        %871 = vmatpush2.msra.mxu0 0.0
        %872 = vmatprep.subr.mxu0 0.0
        %873 = vmatpush2.msra.mxu0 0.0
        %874 = vmatprep.subr.mxu0 0.0
        %875 = vmatpush2.msra.mxu0 0.0
        %876 = vmatprep.subr.mxu0 0.0
        %877 = vmatpush2.msra.mxu0 0.0
        %878 = vmatprep.subr.mxu0 0.0
        %879 = vmatpush2.msra.mxu0 0.0
        %880 = vmatprep.mubr.f32.mxu0 0.0
        %881 = vmatmul.mubr.f32.gmra.mxu0 %v814
        %v882 = vpop.f32.mrf.mxu0
        %v883 = vadd.f32 %v811, %v882
        %v884 = vpop.f32.mrf.mxu0
        %885 = vdwg.mxu0
        %vm886 = vcmask 8192
        %v887 = vsel %vm886, %v883, -inf
        %888 = vmax.xlane.f32.xlu0 %v887
        %v889 = vpop.xlane.xlu0 %888
        %v890 = vsub.f32 %v883, %v889
        %v891 = vmul.f32 %v890, 1.442695
        %v892 = vpow.pop %v891
        %v893 = vsel %vm886, %v892, 0.0
        %894 = vadd.xlane.f32.xlu0 %v893
        %v895 = vpop.xlane.xlu0 %894
        %v896 = vrcp.pop %v895
        %v897 = vmul.f32 %v892, %v896
        %898 = vst.msk [vmem:[%s270] sm:$0x1] %vm886, %v897
        %s899 = sand.u32 %s181, 1
        %s900 = scalar_lea.sflag [#allocation3], %s899
        %s901 = sand.u32 %s181, 1
        %s902 = scalar_lea.vmem [#allocation2], %s901
        // Predicated region
        $region49: #{mymodel_forward.1} parent=47 // pred_check
          %p903 = pneg %p191
        $region50: #{mymodel_forward.1} parent=47 // pred_check_branch
          %905 = sbr.rel (%p903) target = $region52
        $region51: #{mymodel_forward.1} parent=47 // pred_region
          %s907 = ssub.s32 16, 16
          %908 = vsyncadd %s900, %s907
          %s909 = smul.addr %s21, 16
          %s910 = scalar_lea.hbm %s7, %s909
          %s912 = sshll.u32 %s902, 4
          %s913 = int_to_ptr.vmem [resolvable:$true] %s912
          %915 = dma.vmem_to_hbm [thread:$0]  %s913, 16, %s910, %s900
        $region52: #{mymodel_forward.1} parent=47 // pred_fallthru
          _
      $region48: #{mymodel_forward.1} parent=5 // pred_fallthru
        _
      %p916 = scmp.le.s32.totalorder 2, %s16
      // Predicated region
      $region53: #{mymodel_forward.1} parent=5 // pred_check
        %p917 = pneg %p916
      $region54: #{mymodel_forward.1} parent=5 // pred_check_branch
        %919 = sbr.rel (%p917) target = $region56
      $region55: #{mymodel_forward.1} parent=5 // pred_region
        %s920 = ssub.s32 %s16, 2
        // Predicated region
        $region57: #{mymodel_forward.1} parent=55 // pred_check
          %p921 = pneg %p197
        $region58: #{mymodel_forward.1} parent=55 // pred_check_branch
          %923 = sbr.rel (%p921) target = $region60
        $region59: #{mymodel_forward.1} parent=55 // pred_region
          %s924 = sand.u32 %s182, 1
          %s925 = scalar_lea.sflag [#allocation3], %s924
          %s926 = sand.u32 %s182, 1
          %s927 = scalar_lea.vmem [#allocation2], %s926
          %928 = dma.done %s925, 16
        $region60: #{mymodel_forward.1} parent=55 // pred_fallthru
          _
      $region56: #{mymodel_forward.1} parent=5 // pred_fallthru
        _
    $region6: #{mymodel_forward.1} parent=1 // loop_footer
      %s20 = sadd.s32 1, %s16
    $region7: #{mymodel_forward.1} parent=1 // loop_footer_branch
      %15 = sbr.rel target = $region3
    $region8: #{mymodel_forward.1} parent=1 // loop_exit
      _
    %929 = vsyncpa [#allocation3], 1
    %s930 = scalar_lea.sflag [#allocation3], 1
    %931 = vsyncpa %s930, 1

</llo_original>
